<compile_context>
chip_gen: v6e
topology: v6e:2x2x1
jax: 0.10.0
libtpu: 0.0.40
codegen_flags: <defaults>
</compile_context>

<pallas_src>
import math

import jax
import jax.numpy as jnp
from jax.experimental import pallas as pl
from jax.experimental.pallas import tpu as pltpu


def make_positional_encoding(d_model: int, max_len: int = 5000) -> jnp.ndarray:
    """Reproduce the reference module's buffer exactly:
       pe[pos, i]   = sin(pos / 10000**(i / d_model))       (even columns)
       pe[pos, i+1] = cos(pos / 10000**((i+1) / d_model))   (odd columns)
    Every column uses exponent col/d_model — this matches the provided PyTorch
    source (intentionally NOT the canonical shared-div_term formula)."""
    pos = jnp.arange(max_len, dtype=jnp.float32)[:, None]        # [max_len, 1]
    col = jnp.arange(d_model, dtype=jnp.float32)[None, :]        # [1, d_model]
    angles = pos / jnp.power(10000.0, col / float(d_model))      # [max_len, d_model]
    is_even = (jnp.arange(d_model) % 2) == 0
    return jnp.where(is_even[None, :], jnp.sin(angles), jnp.cos(angles)).astype(jnp.float32)


def _add_pe_kernel_2d(x_ref, pe_ref, o_ref):
    # x_ref/o_ref: (tr, 128) — batch dim squeezed out of the block.
    o_ref[...] = x_ref[...] + pe_ref[...]


def _add_pe_kernel_3d(x_ref, pe_ref, o_ref):
    # x_ref/o_ref: (bt, tr, 128) — several batch elems fused per block;
    # pe_ref: (tr, 128), broadcast over the fused batch axis.
    o_ref[...] = x_ref[...] + pe_ref[...][None, :, :]


_LANE = 128
_TARGET_BLOCK_BYTES = 4 * 1024 * 1024   # ~4 MiB x blocks (per-gen sweet spot, v7x-driven)
_VMEM_LIMIT_BYTES = 40 * 1024 * 1024    # double-buffered x/out/pe blocks, safe on v7x (64 MiB)


def positional_encoding_forward(x: jnp.ndarray, pe: jnp.ndarray) -> jnp.ndarray:
    """x: [B, S, D], pe: [max_len, D] -> x + pe[:S] broadcast over batch."""
    B, S, D = x.shape
    max_len = pe.shape[0]
    if S > max_len:
        raise ValueError(f"seq_len={S} exceeds positional-encoding max_len={max_len}")

    dtype = x.dtype
    itemsize = jnp.dtype(dtype).itemsize
    sublane_align = max(8, 32 // itemsize)      # 8 (f32), 16 (bf16), 32 (int8/fp8)

    pe_slice = pe[:S, :].astype(dtype)

    # --- Lane-dense view: flatten per-batch slab, pad to a multiple of 128. ---
    flat = S * D
    rows = pl.cdiv(flat, _LANE)
    padded_flat = rows * _LANE
    pad = padded_flat - flat

    x_flat = x.reshape(B, flat)
    pe_flat = pe_slice.reshape(flat)
    if pad:
        x_flat = jnp.pad(x_flat, ((0, 0), (0, pad)))
        pe_flat = jnp.pad(pe_flat, ((0, pad),))

    x_view = x_flat.reshape(B, rows, _LANE)
    pe_view = pe_flat.reshape(rows, _LANE)
    B_eff, rows_eff = B, rows

    # --- Tiny-slab guard: fold batch elements into the sublane axis so the ---
    # --- second-to-last block dim reaches a multiple of 8.                 ---
    if rows < 8 and B > 1:
        g = 8 // math.gcd(rows, 8)              # smallest g with (g*rows) % 8 == 0
        if B % g == 0:
            B_eff = B // g
            rows_eff = g * rows
            x_view = x_flat.reshape(B_eff, rows_eff, _LANE)
            pe_view = jnp.tile(pe_view, (g, 1))
        # else: fall through — full-extent blocks below are still correct.

    per_batch_bytes = rows_eff * _LANE * itemsize

    if B_eff == 1 or per_batch_bytes >= _TARGET_BLOCK_BYTES:
        # Big per-batch slab: one (squeezed) batch element per block, tile rows.
        bt = 1
        max_rows = max(sublane_align, _TARGET_BLOCK_BYTES // (_LANE * itemsize))
        if rows_eff <= max_rows:
            tr = rows_eff
        else:
            tr = (max_rows // sublane_align) * sublane_align
    else:
        # Small per-batch slab: fuse batch rows per block to amortize the
        # ~0.35 us per-grid-step overhead (tiny inputs collapse to one block).
        bt = min(B_eff, max(1, _TARGET_BLOCK_BYTES // per_batch_bytes))
        tr = rows_eff

    grid = (pl.cdiv(rows_eff, tr), pl.cdiv(B_eff, bt))

    if bt == 1:
        kernel = _add_pe_kernel_2d
        x_block = (None, tr, _LANE)             # batch dim squeezed
    else:
        kernel = _add_pe_kernel_3d
        x_block = (bt, tr, _LANE)

    out = pl.pallas_call(
        kernel,
        out_shape=jax.ShapeDtypeStruct((B_eff, rows_eff, _LANE), dtype),
        grid=grid,
        in_specs=[
            pl.BlockSpec(x_block, lambda r, b: (b, r, 0)),
            # pe indexed only by the outer row-tile axis: stays resident across
            # the inner batch loop (re-DMA'd only when the row tile changes).
            pl.BlockSpec((tr, _LANE), lambda r, b: (r, 0)),
        ],
        out_specs=pl.BlockSpec(x_block, lambda r, b: (b, r, 0)),
        input_output_aliases={0: 0},            # x aliased to out: halves peak HBM footprint
        compiler_params=pltpu.CompilerParams(
            dimension_semantics=("parallel", "parallel"),
            vmem_limit_bytes=_VMEM_LIMIT_BYTES,
        ),
    )(x_view, pe_view)

    out = out.reshape(B, padded_flat)
    if pad:
        out = out[:, :flat]
    return out.reshape(B, S, D)


def _check(B, S, D, max_len, key, dtype=jnp.float32, atol=1e-6):
    x = jax.random.normal(key, (B, S, D), dtype=jnp.float32).astype(dtype)
    pe = make_positional_encoding(D, max_len)
    out = jax.block_until_ready(positional_encoding_forward(x, pe))
    ref = (x.astype(jnp.float32) + pe[None, :S, :]).astype(dtype)
    assert out.shape == (B, S, D)
    assert jnp.allclose(out.astype(jnp.float32), ref.astype(jnp.float32), atol=atol), \
        f"mismatch vs reference at shape {(B, S, D)}"


if __name__ == "__main__":
    key = jax.random.PRNGKey(0)
    k0, k1, k2 = jax.random.split(key, 3)

    # Primary case implied by forward(): [batch_size, seq_len, d_model]
    _check(B=2, S=8, D=32, max_len=64, key=k0)
    # Tiny-slab batch-fold path (B divisible by fold factor).
    _check(B=4, S=8, D=32, max_len=64, key=k1)
    # Non-multiple-of-128 slab -> lane padding path.
    _check(B=2, S=7, D=33, max_len=64, key=k2)

    print("KERNEL_OK")
</pallas_src>

<mosaic_0001>
module attributes {stable_mosaic.version = 11 : i64} {
  func.func @_add_pe_kernel_3d(%arg0: i32, %arg1: i32, %arg2: memref<2x2x128xf32, #tpu.memory_space<vmem>>, %arg3: memref<2x128xf32, #tpu.memory_space<vmem>>, %arg4: memref<2x2x128xf32, #tpu.memory_space<vmem>>) attributes {dimension_semantics = [#tpu.dimension_semantics<parallel>, #tpu.dimension_semantics<parallel>], iteration_bounds = array<i64: 1, 1>, scalar_prefetch = 0 : i64, scratch_operands = 0 : i64, tpu.core_type = #tpu.core_type<tc>, window_params = [{transform_indices = @transform_0, window_bounds = array<i64: 2, 2, 128>}, {transform_indices = @transform_1, window_bounds = array<i64: 2, 128>}, {transform_indices = @transform_2, window_bounds = array<i64: 2, 2, 128>}]} {
    %c0 = arith.constant 0 : index
    %c0_0 = arith.constant 0 : index
    %c0_1 = arith.constant 0 : index
    %0 = vector.load %arg2[%c0, %c0_0, %c0_1] : memref<2x2x128xf32, #tpu.memory_space<vmem>>, vector<2x2x128xf32>
    %c0_2 = arith.constant 0 : index
    %c0_3 = arith.constant 0 : index
    %1 = vector.load %arg3[%c0_2, %c0_3] : memref<2x128xf32, #tpu.memory_space<vmem>>, vector<2x128xf32>
    %2 = vector.shape_cast %1 : vector<2x128xf32> to vector<1x2x128xf32>
    %3 = vector.broadcast %2 : vector<1x2x128xf32> to vector<2x2x128xf32>
    %4 = arith.addf %0, %3 : vector<2x2x128xf32>
    %c0_4 = arith.constant 0 : index
    %c0_5 = arith.constant 0 : index
    %c0_6 = arith.constant 0 : index
    %5 = vector.load %arg4[%c0_4, %c0_5, %c0_6] : memref<2x2x128xf32, #tpu.memory_space<vmem>>, vector<2x2x128xf32>
    tpu.vector_store %arg4[%c0_4, %c0_5, %c0_6], %4 {strides = array<i32>} : memref<2x2x128xf32, #tpu.memory_space<vmem>>, vector<2x2x128xf32>,
    return
  }
  func.func @transform_0(%arg0: i32, %arg1: i32) -> (i32, i32, i32) {
    %c0_i32 = arith.constant 0 : i32
    %c0_i32_0 = arith.constant 0 : i32
    return %arg1, %arg0, %c0_i32 : i32, i32, i32
  }
  func.func @transform_1(%arg0: i32, %arg1: i32) -> (i32, i32) {
    %c0_i32 = arith.constant 0 : i32
    %c0_i32_0 = arith.constant 0 : i32
    return %arg0, %c0_i32 : i32, i32
  }
  func.func @transform_2(%arg0: i32, %arg1: i32) -> (i32, i32, i32) {
    %c0_i32 = arith.constant 0 : i32
    %c0_i32_0 = arith.constant 0 : i32
    return %arg1, %arg0, %c0_i32 : i32, i32, i32
  }
}

</mosaic_0001>

<llo_original>
// kernel: tpu_custom_call.1
$region0: #{tpu_custom_call.1}
  #allocation0 [shape = 'u32[]', space=smem, size = 0x4, offset = 0x4, fixed_abs, tag = 'smem constant byte address 0x4 - core index']
  #allocation1 [shape = 'u32[144,128]{1,0:T(1,128)}', space=vmem, size = 0x12000, scoped, tag = 'internal scratch']
  %s0 = inlined_call_operand.hbm [shape: f32[2,2,128], index: 0, kind: input, shape index: {}, may-alias: {0,2}]
  %s1 = inlined_call_operand.vmem [shape: f32[2,128], index: 1, kind: input, shape index: {}]
  %s2 = inlined_call_operand.hbm [shape: f32[2,2,128], index: 2, kind: output, shape index: {}, may-alias: {0,2}]
  %s3 = sld [smem:[#allocation0]]
  $region22: #{tpu_custom_call.1} parent=0
    _
  %s5 = ssub.s32 1, %s3
  %s6 = scalar_select 0, %s5, %s3
  $region1: #{tpu_custom_call.1} parent=0
    #allocation2 [shape = 'u8[2048]{0}', space=vmem, size = 0x800, scoped, tag = 'input window, operand 0, single buffered']
    #allocation3 [shape = 's32[1]{0}', space=sflag, size = 0x4, scoped, tag = 'scoped memory for tpu_custom_call.1']
    #allocation4 [shape = 's32[1]{0}', space=sflag, size = 0x4, scoped, tag = 'scoped memory for tpu_custom_call.1']
    #allocation5 [shape = 'u8[2048]{0}', space=vmem, size = 0x800, scoped, tag = 'output window, operand 0, single buffered']
    %7 = vsyncpa [#allocation3], 0
    %8 = vsyncpa [#allocation4], 0
    // Predicated region
    $region2: #{tpu_custom_call.1} parent=1 // pred_check
      _
    $region3: #{tpu_custom_call.1} parent=1 // pred_check_branch
      %10 = sbr.rel (0) target = $region5
    $region4: #{tpu_custom_call.1} parent=1 // pred_region
      %s12 = ssub.s32 64, 64
      %13 = vsyncadd [#allocation3], %s12
      %s14 = sshll.u32 [#allocation2], 4
      %s15 = int_to_ptr.vmem [resolvable:$true] %s14
      %20 = dma.hbm_to_vmem [thread:$0]  %s0, 64, %s15, [#allocation3], 32, 32, 2
    $region5: #{tpu_custom_call.1} parent=1 // pred_fallthru
      _
    // Predicated region
    $region6: #{tpu_custom_call.1} parent=1 // pred_check
      _
    $region7: #{tpu_custom_call.1} parent=1 // pred_check_branch
      %22 = sbr.rel (0) target = $region9
    $region8: #{tpu_custom_call.1} parent=1 // pred_region
      _
    $region9: #{tpu_custom_call.1} parent=1 // pred_fallthru
      _
    // Predicated region
    $region10: #{tpu_custom_call.1} parent=1 // pred_check
      _
    $region11: #{tpu_custom_call.1} parent=1 // pred_check_branch
      %24 = sbr.rel (0) target = $region13
    $region12: #{tpu_custom_call.1} parent=1 // pred_region
      %25 = dma.done [#allocation3], 64
    $region13: #{tpu_custom_call.1} parent=1 // pred_fallthru
      _
    %v26 = vld [vmem:[#allocation2] sm:$0x3]
    %v27 = vld [vmem:[#allocation2 + $0x2] sm:$0x3]
    %v28 = vld [vmem:[%s1] sm:$0x3]
    %v29 = vadd.f32 %v26, %v28
    %v30 = vadd.f32 %v27, %v28
    %31 = vst [vmem:[#allocation5] sm:$0x3] %v29
    %32 = vst [vmem:[#allocation5 + $0x2] sm:$0x3] %v30
    // Predicated region
    $region14: #{tpu_custom_call.1} parent=1 // pred_check
      _
    $region15: #{tpu_custom_call.1} parent=1 // pred_check_branch
      %34 = sbr.rel (0) target = $region17
    $region16: #{tpu_custom_call.1} parent=1 // pred_region
      %s36 = ssub.s32 64, 64
      %37 = vsyncadd [#allocation4], %s36
      %s38 = sshll.u32 [#allocation5], 4
      %s39 = int_to_ptr.vmem [resolvable:$true] %s38
      %44 = dma.vmem_to_hbm [thread:$0]  %s39, 64, %s2, [#allocation4], 32, 32, 2
    $region17: #{tpu_custom_call.1} parent=1 // pred_fallthru
      _
    // Predicated region
    $region18: #{tpu_custom_call.1} parent=1 // pred_check
      _
    $region19: #{tpu_custom_call.1} parent=1 // pred_check_branch
      %46 = sbr.rel (0) target = $region21
    $region20: #{tpu_custom_call.1} parent=1 // pred_region
      %47 = dma.done [#allocation4], 64
    $region21: #{tpu_custom_call.1} parent=1 // pred_fallthru
      _
    %48 = vsyncpa [#allocation3], 1
    %49 = vsyncpa [#allocation4], 1

</llo_original>
